<compile_context>
chip_gen: v7x
topology: tpu7x:2x2x1
jax: 0.10.0
libtpu: 0.0.40
codegen_flags: <defaults>
</compile_context>

<pallas_src>
import jax
import jax.numpy as jnp
from jax.experimental import pallas as pl
from jax.experimental.pallas import tpu as pltpu


# ---------------------------------------------------------------------------
# Parameter preparation shared by kernel wrapper and reference.
# ---------------------------------------------------------------------------
def prepare_params(params, c2):
    """Fold BN scale into conv weights, transpose to (Cout, Cin), cast to bf16.

    params: list of (w:(Cin,Cout) f32, scale:(1,Cout) f32, shift:(1,Cout) f32)
    Returns ((w0_known:(Cout0,C2) bf16, w0_unknown:(Cout0,C1) bf16,
              b0:(Cout0,1) f32), rest=[(wt:(Cout,Cin) bf16, b:(Cout,1) f32)])
    """
    folded = []
    for (w, scale, shift) in params:
        wt = (w * scale).T.astype(jnp.bfloat16)      # (Cout, Cin), BN folded
        b = shift.T.astype(jnp.float32)              # (Cout, 1)
        folded.append((wt, b))
    wt0, b0 = folded[0]
    first = (wt0[:, :c2], wt0[:, c2:], b0)           # split: interp | unknow
    return first, folded[1:]


# ---------------------------------------------------------------------------
# Generation-aware VMEM / tile sizing
# ---------------------------------------------------------------------------
def _vmem_capacity_bytes():
    try:
        info = pltpu.get_tpu_info()
        cap = getattr(info, "vmem_capacity_bytes", None)
        if cap:
            return int(cap)
    except Exception:
        pass
    try:
        kind = jax.devices()[0].device_kind.lower()
        if "v7" in kind:
            return 64 << 20
        if ("v5" in kind) or ("v6" in kind):
            return 128 << 20
    except Exception:
        pass
    return 64 << 20          # conservative default (v7x-sized)


def _choose_tile_n(n_pad, m, vmem_bytes):
    """Largest lane-dense TN (multiple of 128, divides n_pad) whose (m, TN)
    f32/i32 working set fits a generation-aware temp budget."""
    if vmem_bytes >= (96 << 20):       # v5e / v6e: 128 MiB physical VMEM
        budget = 24 << 20
        cap = 1024 if m <= 1024 else 512
    else:                              # v7x: 64 MiB physical VMEM
        budget = 8 << 20
        cap = 512 if m < 2048 else 256
    per_col = 7 * 4 * max(1, m)        # ~7 live (m, TN) f32/i32 temporaries
    cols = max(128, budget // per_col)
    tn = min(cap, (cols // 128) * 128, n_pad)
    tn = max(tn, 128)
    while tn > 128 and n_pad % tn != 0:
        tn -= 128
    return tn


# ---------------------------------------------------------------------------
# Pallas kernel (one (batch, n-tile) per grid step)
# ---------------------------------------------------------------------------
def _make_fp_kernel(num_layers):
    n_rest = num_layers - 1

    def kernel(*refs):
        u_ref, kxyz_ref, uf_ref, kf_ref = refs[:4]
        w0k_ref, w0u_ref, b0_ref = refs[4:7]
        rest_refs = refs[7:7 + 2 * n_rest]
        out_ref = refs[7 + 2 * n_rest]

        u = u_ref[0]          # (3, TN)   f32
        kxyz = kxyz_ref[0]    # (m, 3)    f32
        uf = uf_ref[0]        # (C1, TN)  bf16
        kf = kf_ref[0]        # (C2, m)   bf16

        m = kxyz.shape[0]

        # Exact per-coordinate squared distances on the VPU (d >= 0 by
        # construction, no cancellation, preserves three_nn tie ordering).
        # d[j, i] = || known[j] - unknown[i] ||^2, shape (m, TN).
        d = ((kxyz[:, 0:1] - u[0:1, :]) ** 2
             + (kxyz[:, 1:2] - u[1:2, :]) ** 2
             + (kxyz[:, 2:3] - u[2:3, :]) ** 2)

        row = jax.lax.broadcasted_iota(jnp.int32, d.shape, 0)   # (m, TN)

        def pick(dcur):
            dmin = jnp.min(dcur, axis=0, keepdims=True)          # (1, TN)
            idx = jnp.min(jnp.where(dcur == dmin, row, m),
                          axis=0, keepdims=True)                 # (1, TN)
            return dmin, row == idx                              # mask (m, TN)

        # streaming top-3 (m >= 3, as pointops.three_nn assumes); each pick's
        # mask is reused for masking the next pick AND for building w_t.
        d1, mask1 = pick(d)
        d_m = jnp.where(mask1, jnp.inf, d)
        d2, mask2 = pick(d_m)
        d_m = jnp.where(mask2, jnp.inf, d_m)
        d3, mask3 = pick(d_m)

        # inverse-distance weights: approx (EUP) reciprocals for the three
        # distances, exact reciprocal for the normalizer (no compounding of
        # two approximations on the final weights).
        r1 = pl.reciprocal(d1 + 1e-8, approx=True)
        r2 = pl.reciprocal(d2 + 1e-8, approx=True)
        r3 = pl.reciprocal(d3 + 1e-8, approx=True)
        inv_norm = 1.0 / (r1 + r2 + r3)

        w1 = r1 * inv_norm
        w2 = r2 * inv_norm
        w3 = r3 * inv_norm

        # sparse interpolation weights as a dense (m, TN) matrix via nested
        # selects over disjoint masks; single f32->bf16 cast for the MXU.
        w_t = jnp.where(mask1, w1,
                        jnp.where(mask2, w2,
                                  jnp.where(mask3, w3, 0.0)))

        # interpolation on the MXU (bf16 operands, f32 accumulation)
        interp = jnp.dot(kf, w_t.astype(jnp.bfloat16),
                         preferred_element_type=jnp.float32)     # (C2, TN)

        # first MLP layer with split weight: equivalent to concat([interp, uf])
        # along channels followed by the 1x1 conv, without a sublane concat.
        x = jnp.dot(w0k_ref[...], interp.astype(jnp.bfloat16),
                    preferred_element_type=jnp.float32)
        x = x + jnp.dot(w0u_ref[...], uf,
                        preferred_element_type=jnp.float32)
        x = jnp.maximum(x + b0_ref[...], 0.0)                    # (C_h, TN)

        for l in range(n_rest):
            wt = rest_refs[2 * l][...]                           # (Cout, Cin) bf16
            b = rest_refs[2 * l + 1][...]                        # (Cout, 1)   f32
            x = jnp.maximum(
                jnp.dot(wt, x.astype(jnp.bfloat16),
                        preferred_element_type=jnp.float32) + b, 0.0)

        out_ref[0] = x.astype(out_ref.dtype)                     # (Cout, TN)

    return kernel


def pointnet2_fp_forward(unknown, known, unknow_feats, known_feats, params,
                         out_dtype=jnp.float32):
    """Mirrors PointNet2FPModule.forward (use_paconv=False, bn folded).

    unknown:       (B, n, 3)
    known:         (B, m, 3)
    unknow_feats:  (B, C1, n)
    known_feats:   (B, C2, m)
    params: list of (w:(Cin,Cout), scale:(1,Cout), shift:(1,Cout)) per layer
    returns:       (B, mlp[-1], n)
    """
    B, n, _ = unknown.shape
    _, m, _ = known.shape
    C1 = unknow_feats.shape[1]
    C2 = known_feats.shape[1]
    num_layers = len(params)
    Cout = params[-1][0].shape[1]
    assert params[0][0].shape[0] == C1 + C2, "mlp[0] must equal C1 + C2"
    assert m >= 3, "three_nn requires at least 3 known points"

    # Pad n to a multiple of 128 so all (m, TN) temps + output are lane-dense.
    n_pad = ((n + 127) // 128) * 128

    # tiny coordinate transpose only; the big feature tensors stay channels-first
    unknown_t = jnp.transpose(unknown, (0, 2, 1))        # (B, 3, n)
    if n_pad != n:
        unknown_t = jnp.pad(unknown_t, ((0, 0), (0, 0), (0, n_pad - n)))
        unknow_feats = jnp.pad(unknow_feats, ((0, 0), (0, 0), (0, n_pad - n)))

    uf_bf16 = unknow_feats.astype(jnp.bfloat16)          # halve its DMA bytes
    kf_bf16 = known_feats.astype(jnp.bfloat16)           # (B, C2, m)

    (w0k, w0u, b0), rest = prepare_params(params, C2)
    flat_params = [w0k, w0u, b0]
    for (wt, b) in rest:
        flat_params += [wt, b]

    vmem_bytes = _vmem_capacity_bytes()
    tn = _choose_tile_n(n_pad, m, vmem_bytes)
    vmem_limit = int(min(vmem_bytes - (16 << 20), 64 << 20))
    grid = (B, n_pad // tn)

    in_specs = [
        pl.BlockSpec((1, 3, tn), lambda b, t: (b, 0, t)),      # unknown xyz tile
        pl.BlockSpec((1, m, 3), lambda b, t: (b, 0, 0)),       # known xyz (resident)
        pl.BlockSpec((1, C1, tn), lambda b, t: (b, 0, t)),     # unknow feats tile (bf16)
        pl.BlockSpec((1, C2, m), lambda b, t: (b, 0, 0)),      # known feats (resident)
    ]
    for p in flat_params:
        in_specs.append(pl.BlockSpec(p.shape, lambda b, t: (0, 0)))

    out = pl.pallas_call(
        _make_fp_kernel(num_layers),
        out_shape=jax.ShapeDtypeStruct((B, Cout, n_pad), out_dtype),
        grid=grid,
        in_specs=in_specs,
        out_specs=pl.BlockSpec((1, Cout, tn), lambda b, t: (b, 0, t)),
        compiler_params=pltpu.CompilerParams(
            dimension_semantics=("parallel", "parallel"),
            vmem_limit_bytes=vmem_limit),
    )(unknown_t, known, uf_bf16, kf_bf16, *flat_params)

    if n_pad != n:
        out = out[:, :, :n]
    return out    # (B, mlp[-1], n) -- channels-first, as in PyTorch


# ---------------------------------------------------------------------------
# Pure-JAX reference (same math: same distances, same bf16 casts) for checks.
# ---------------------------------------------------------------------------
def pointnet2_fp_reference(unknown, known, unknow_feats, known_feats, params):
    C2 = known_feats.shape[1]
    m = known.shape[1]
    unknown_t = jnp.transpose(unknown, (0, 2, 1))
    uf_bf16 = unknow_feats.astype(jnp.bfloat16)
    kf_bf16 = known_feats.astype(jnp.bfloat16)
    (w0k, w0u, b0), rest = prepare_params(params, C2)

    def one(u, kxyz, uf, kf):
        d = ((kxyz[:, 0:1] - u[0:1, :]) ** 2
             + (kxyz[:, 1:2] - u[1:2, :]) ** 2
             + (kxyz[:, 2:3] - u[2:3, :]) ** 2)
        row = jax.lax.broadcasted_iota(jnp.int32, d.shape, 0)

        def pick(dcur):
            dmin = jnp.min(dcur, axis=0, keepdims=True)
            idx = jnp.min(jnp.where(dcur == dmin, row, m),
                          axis=0, keepdims=True)
            return dmin, row == idx

        d1, mask1 = pick(d)
        d_m = jnp.where(mask1, jnp.inf, d)
        d2, mask2 = pick(d_m)
        d_m = jnp.where(mask2, jnp.inf, d_m)
        d3, mask3 = pick(d_m)

        r1 = 1.0 / (d1 + 1e-8)
        r2 = 1.0 / (d2 + 1e-8)
        r3 = 1.0 / (d3 + 1e-8)
        inv_norm = 1.0 / (r1 + r2 + r3)

        w_t = jnp.where(mask1, r1 * inv_norm,
                        jnp.where(mask2, r2 * inv_norm,
                                  jnp.where(mask3, r3 * inv_norm, 0.0)))

        interp = jnp.dot(kf, w_t.astype(jnp.bfloat16),
                         preferred_element_type=jnp.float32)
        x = jnp.dot(w0k, interp.astype(jnp.bfloat16),
                    preferred_element_type=jnp.float32)
        x = x + jnp.dot(w0u, uf, preferred_element_type=jnp.float32)
        x = jnp.maximum(x + b0, 0.0)
        for (wt, b) in rest:
            x = jnp.maximum(jnp.dot(wt, x.astype(jnp.bfloat16),
                                    preferred_element_type=jnp.float32) + b,
                            0.0)
        return x

    return jax.vmap(one)(unknown_t, known, uf_bf16, kf_bf16)


# ---------------------------------------------------------------------------
# Deterministic parameter construction (SharedMLP: conv1x1 no-bias + BN)
# ---------------------------------------------------------------------------
def make_shared_mlp_params(mlp, key):
    params = []
    for l in range(len(mlp) - 1):
        cin, cout = mlp[l], mlp[l + 1]
        key, kw, kg, kb, km, kv = jax.random.split(key, 6)
        w = 0.1 * jax.random.normal(kw, (cin, cout), dtype=jnp.float32)
        gamma = 1.0 + 0.1 * jax.random.normal(kg, (cout,), dtype=jnp.float32)
        beta = 0.1 * jax.random.normal(kb, (cout,), dtype=jnp.float32)
        running_mean = 0.05 * jax.random.normal(km, (cout,), dtype=jnp.float32)
        running_var = 1.0 + 0.1 * jax.random.uniform(kv, (cout,),
                                                     dtype=jnp.float32)
        eps = 1e-5  # torch.nn.BatchNorm2d default
        scale = gamma / jnp.sqrt(running_var + eps)
        shift = beta - running_mean * scale
        params.append((w, scale.reshape(1, cout), shift.reshape(1, cout)))
    return params


if __name__ == "__main__":
    # Small shapes consistent with the module's forward signature.
    B, n, m = 2, 16, 8
    C1, C2 = 6, 10
    mlp = [C2 + C1, 32, 16]     # mlp[0] must equal C2 + C1

    key = jax.random.PRNGKey(0)
    k1, k2, k3, k4, kp = jax.random.split(key, 5)
    unknown = jax.random.uniform(k1, (B, n, 3), dtype=jnp.float32)
    known = jax.random.uniform(k2, (B, m, 3), dtype=jnp.float32)
    unknow_feats = jax.random.normal(k3, (B, C1, n), dtype=jnp.float32)
    known_feats = jax.random.normal(k4, (B, C2, m), dtype=jnp.float32)

    params = make_shared_mlp_params(mlp, kp)

    out = pointnet2_fp_forward(unknown, known, unknow_feats, known_feats,
                               params)
    out = jax.block_until_ready(out)

    ref = pointnet2_fp_reference(unknown, known, unknow_feats, known_feats,
                                 params)
    ref = jax.block_until_ready(ref)

    assert out.shape == (B, mlp[-1], n), out.shape
    assert bool(jnp.allclose(out, ref, rtol=3e-2, atol=3e-2)), (
        "Pallas kernel output mismatch vs reference")

    print("KERNEL_OK")
</pallas_src>

<mosaic_0001>
module attributes {stable_mosaic.version = 11 : i64} {
  func.func @kernel(%arg0: i32, %arg1: i32, %arg2: memref<1x3x128xf32, #tpu.memory_space<vmem>>, %arg3: memref<1x8x3xf32, #tpu.memory_space<vmem>>, %arg4: memref<1x6x128xbf16, #tpu.memory_space<vmem>>, %arg5: memref<1x10x8xbf16, #tpu.memory_space<vmem>>, %arg6: memref<32x10xbf16, #tpu.memory_space<vmem>>, %arg7: memref<32x6xbf16, #tpu.memory_space<vmem>>, %arg8: memref<32x1xf32, #tpu.memory_space<vmem>>, %arg9: memref<16x32xbf16, #tpu.memory_space<vmem>>, %arg10: memref<16x1xf32, #tpu.memory_space<vmem>>, %arg11: memref<1x16x128xf32, #tpu.memory_space<vmem>>) attributes {dimension_semantics = [#tpu.dimension_semantics<parallel>, #tpu.dimension_semantics<parallel>], iteration_bounds = array<i64: 2, 1>, scalar_prefetch = 0 : i64, scratch_operands = 0 : i64, tpu.core_type = #tpu.core_type<tc>, window_params = [{transform_indices = @transform_0, window_bounds = array<i64: 1, 3, 128>}, {transform_indices = @transform_1, window_bounds = array<i64: 1, 8, 3>}, {transform_indices = @transform_2, window_bounds = array<i64: 1, 6, 128>}, {transform_indices = @transform_3, window_bounds = array<i64: 1, 10, 8>}, {pipeline_mode = #tpu.pipeline_mode<synchronous>, transform_indices = @transform_4, window_bounds = array<i64: 32, 10>}, {pipeline_mode = #tpu.pipeline_mode<synchronous>, transform_indices = @transform_5, window_bounds = array<i64: 32, 6>}, {pipeline_mode = #tpu.pipeline_mode<synchronous>, transform_indices = @transform_6, window_bounds = array<i64: 32, 1>}, {pipeline_mode = #tpu.pipeline_mode<synchronous>, transform_indices = @transform_7, window_bounds = array<i64: 16, 32>}, {pipeline_mode = #tpu.pipeline_mode<synchronous>, transform_indices = @transform_8, window_bounds = array<i64: 16, 1>}, {transform_indices = @transform_9, window_bounds = array<i64: 1, 16, 128>}]} {
    %c0 = arith.constant 0 : index
    %c0_0 = arith.constant 0 : index
    %c0_1 = arith.constant 0 : index
    %0 = vector.load %arg2[%c0, %c0_0, %c0_1] : memref<1x3x128xf32, #tpu.memory_space<vmem>>, vector<1x3x128xf32>
    %1 = vector.shape_cast %0 : vector<1x3x128xf32> to vector<3x128xf32>
    %c0_2 = arith.constant 0 : index
    %c0_3 = arith.constant 0 : index
    %c0_4 = arith.constant 0 : index
    %2 = vector.load %arg3[%c0_2, %c0_3, %c0_4] : memref<1x8x3xf32, #tpu.memory_space<vmem>>, vector<1x8x3xf32>
    %3 = vector.shape_cast %2 : vector<1x8x3xf32> to vector<8x3xf32>
    %c0_5 = arith.constant 0 : index
    %c0_6 = arith.constant 0 : index
    %c0_7 = arith.constant 0 : index
    %4 = vector.load %arg4[%c0_5, %c0_6, %c0_7] : memref<1x6x128xbf16, #tpu.memory_space<vmem>>, vector<1x6x128xbf16>
    %5 = vector.shape_cast %4 : vector<1x6x128xbf16> to vector<6x128xbf16>
    %c0_8 = arith.constant 0 : index
    %c0_9 = arith.constant 0 : index
    %c0_10 = arith.constant 0 : index
    %6 = vector.load %arg5[%c0_8, %c0_9, %c0_10] : memref<1x10x8xbf16, #tpu.memory_space<vmem>>, vector<1x10x8xbf16>
    %7 = vector.shape_cast %6 : vector<1x10x8xbf16> to vector<10x8xbf16>
    %8 = vector.extract_strided_slice %3 {offsets = [0, 0], sizes = [8, 1], strides = [1, 1]} : vector<8x3xf32> to vector<8x1xf32>
    %9 = vector.extract_strided_slice %1 {offsets = [0, 0], sizes = [1, 128], strides = [1, 1]} : vector<3x128xf32> to vector<1x128xf32>
    %10 = vector.broadcast %8 : vector<8x1xf32> to vector<8x128xf32>
    %11 = vector.broadcast %9 : vector<1x128xf32> to vector<8x128xf32>
    %12 = arith.subf %10, %11 : vector<8x128xf32>
    %13 = arith.mulf %12, %12 : vector<8x128xf32>
    %14 = vector.extract_strided_slice %3 {offsets = [0, 1], sizes = [8, 1], strides = [1, 1]} : vector<8x3xf32> to vector<8x1xf32>
    %15 = vector.extract_strided_slice %1 {offsets = [1, 0], sizes = [1, 128], strides = [1, 1]} : vector<3x128xf32> to vector<1x128xf32>
    %16 = vector.broadcast %14 : vector<8x1xf32> to vector<8x128xf32>
    %17 = vector.broadcast %15 : vector<1x128xf32> to vector<8x128xf32>
    %18 = arith.subf %16, %17 : vector<8x128xf32>
    %19 = arith.mulf %18, %18 : vector<8x128xf32>
    %20 = arith.addf %13, %19 : vector<8x128xf32>
    %21 = vector.extract_strided_slice %3 {offsets = [0, 2], sizes = [8, 1], strides = [1, 1]} : vector<8x3xf32> to vector<8x1xf32>
    %22 = vector.extract_strided_slice %1 {offsets = [2, 0], sizes = [1, 128], strides = [1, 1]} : vector<3x128xf32> to vector<1x128xf32>
    %23 = vector.broadcast %21 : vector<8x1xf32> to vector<8x128xf32>
    %24 = vector.broadcast %22 : vector<1x128xf32> to vector<8x128xf32>
    %25 = arith.subf %23, %24 : vector<8x128xf32>
    %26 = arith.mulf %25, %25 : vector<8x128xf32>
    %27 = arith.addf %20, %26 : vector<8x128xf32>
    %28 = tpu.iota {dimensions = array<i32: 0>} : vector<8x128xi32>
    %cst = arith.constant dense<0x7F800000> : vector<128xf32>
    %29 = vector.multi_reduction <minimumf>, %27, %cst [0] : vector<8x128xf32> to vector<128xf32>
    %30 = vector.shape_cast %29 : vector<128xf32> to vector<1x128xf32>
    %31 = vector.broadcast %30 : vector<1x128xf32> to vector<8x128xf32>
    %32 = arith.cmpf oeq, %27, %31 : vector<8x128xf32>
    %c8_i32 = arith.constant 8 : i32
    %33 = vector.broadcast %c8_i32 : i32 to vector<8x128xi32>
    %34 = arith.select %32, %28, %33 : vector<8x128xi1>, vector<8x128xi32>
    %cst_11 = arith.constant dense<2147483647> : vector<128xi32>
    %35 = vector.multi_reduction <minsi>, %34, %cst_11 [0] : vector<8x128xi32> to vector<128xi32>
    %36 = vector.shape_cast %35 : vector<128xi32> to vector<1x128xi32>
    %37 = vector.broadcast %36 : vector<1x128xi32> to vector<8x128xi32>
    %38 = arith.cmpi eq, %28, %37 : vector<8x128xi32>
    %cst_12 = arith.constant 0x7F800000 : f32
    %39 = vector.broadcast %cst_12 : f32 to vector<8x128xf32>
    %40 = arith.select %38, %39, %27 : vector<8x128xi1>, vector<8x128xf32>
    %cst_13 = arith.constant dense<0x7F800000> : vector<128xf32>
    %41 = vector.multi_reduction <minimumf>, %40, %cst_13 [0] : vector<8x128xf32> to vector<128xf32>
    %42 = vector.shape_cast %41 : vector<128xf32> to vector<1x128xf32>
    %43 = vector.broadcast %42 : vector<1x128xf32> to vector<8x128xf32>
    %44 = arith.cmpf oeq, %40, %43 : vector<8x128xf32>
    %c8_i32_14 = arith.constant 8 : i32
    %45 = vector.broadcast %c8_i32_14 : i32 to vector<8x128xi32>
    %46 = arith.select %44, %28, %45 : vector<8x128xi1>, vector<8x128xi32>
    %cst_15 = arith.constant dense<2147483647> : vector<128xi32>
    %47 = vector.multi_reduction <minsi>, %46, %cst_15 [0] : vector<8x128xi32> to vector<128xi32>
    %48 = vector.shape_cast %47 : vector<128xi32> to vector<1x128xi32>
    %49 = vector.broadcast %48 : vector<1x128xi32> to vector<8x128xi32>
    %50 = arith.cmpi eq, %28, %49 : vector<8x128xi32>
    %cst_16 = arith.constant 0x7F800000 : f32
    %51 = vector.broadcast %cst_16 : f32 to vector<8x128xf32>
    %52 = arith.select %50, %51, %40 : vector<8x128xi1>, vector<8x128xf32>
    %cst_17 = arith.constant dense<0x7F800000> : vector<128xf32>
    %53 = vector.multi_reduction <minimumf>, %52, %cst_17 [0] : vector<8x128xf32> to vector<128xf32>
    %54 = vector.shape_cast %53 : vector<128xf32> to vector<1x128xf32>
    %55 = vector.broadcast %54 : vector<1x128xf32> to vector<8x128xf32>
    %56 = arith.cmpf oeq, %52, %55 : vector<8x128xf32>
    %c8_i32_18 = arith.constant 8 : i32
    %57 = vector.broadcast %c8_i32_18 : i32 to vector<8x128xi32>
    %58 = arith.select %56, %28, %57 : vector<8x128xi1>, vector<8x128xi32>
    %cst_19 = arith.constant dense<2147483647> : vector<128xi32>
    %59 = vector.multi_reduction <minsi>, %58, %cst_19 [0] : vector<8x128xi32> to vector<128xi32>
    %60 = vector.shape_cast %59 : vector<128xi32> to vector<1x128xi32>
    %61 = vector.broadcast %60 : vector<1x128xi32> to vector<8x128xi32>
    %62 = arith.cmpi eq, %28, %61 : vector<8x128xi32>
    %cst_20 = arith.constant 9.99999993E-9 : f32
    %63 = vector.broadcast %cst_20 : f32 to vector<1x128xf32>
    %64 = arith.addf %30, %63 : vector<1x128xf32>
    %65 = tpu.reciprocal %64 {approx = true} : vector<1x128xf32> -> vector<1x128xf32>
    %cst_21 = arith.constant 9.99999993E-9 : f32
    %66 = vector.broadcast %cst_21 : f32 to vector<1x128xf32>
    %67 = arith.addf %42, %66 : vector<1x128xf32>
    %68 = tpu.reciprocal %67 {approx = true} : vector<1x128xf32> -> vector<1x128xf32>
    %cst_22 = arith.constant 9.99999993E-9 : f32
    %69 = vector.broadcast %cst_22 : f32 to vector<1x128xf32>
    %70 = arith.addf %54, %69 : vector<1x128xf32>
    %71 = tpu.reciprocal %70 {approx = true} : vector<1x128xf32> -> vector<1x128xf32>
    %72 = arith.addf %65, %68 : vector<1x128xf32>
    %73 = arith.addf %72, %71 : vector<1x128xf32>
    %cst_23 = arith.constant 1.000000e+00 : f32
    %74 = vector.broadcast %cst_23 : f32 to vector<1x128xf32>
    %75 = arith.divf %74, %73 : vector<1x128xf32>
    %76 = arith.mulf %65, %75 : vector<1x128xf32>
    %77 = arith.mulf %68, %75 : vector<1x128xf32>
    %78 = arith.mulf %71, %75 : vector<1x128xf32>
    %cst_24 = arith.constant 0.000000e+00 : f32
    %79 = vector.shape_cast %78 : vector<1x128xf32> to vector<1x128xf32>
    %80 = vector.broadcast %79 : vector<1x128xf32> to vector<8x128xf32>
    %81 = vector.broadcast %cst_24 : f32 to vector<8x128xf32>
    %82 = arith.select %62, %80, %81 : vector<8x128xi1>, vector<8x128xf32>
    %83 = vector.shape_cast %77 : vector<1x128xf32> to vector<1x128xf32>
    %84 = vector.broadcast %83 : vector<1x128xf32> to vector<8x128xf32>
    %85 = arith.select %50, %84, %82 : vector<8x128xi1>, vector<8x128xf32>
    %86 = vector.shape_cast %76 : vector<1x128xf32> to vector<1x128xf32>
    %87 = vector.broadcast %86 : vector<1x128xf32> to vector<8x128xf32>
    %88 = arith.select %38, %87, %85 : vector<8x128xi1>, vector<8x128xf32>
    %89 = arith.truncf %88 : vector<8x128xf32> to vector<8x128xbf16>
    %cst_25 = arith.constant dense<0.000000e+00> : vector<10x128xf32>
    %90 = tpu.matmul %7, %89, %cst_25 {dimension_numbers = #tpu.dot_dimension_numbers<[1], [0], [0], [1], [0, 0, 1, 1], [], []>} : vector<10x8xbf16>, vector<8x128xbf16>, vector<10x128xf32> -> vector<10x128xf32>
    %c0_26 = arith.constant 0 : index
    %c0_27 = arith.constant 0 : index
    %91 = vector.load %arg6[%c0_26, %c0_27] : memref<32x10xbf16, #tpu.memory_space<vmem>>, vector<32x10xbf16>
    %92 = arith.truncf %90 : vector<10x128xf32> to vector<10x128xbf16>
    %cst_28 = arith.constant dense<0.000000e+00> : vector<32x128xf32>
    %93 = tpu.matmul %91, %92, %cst_28 {dimension_numbers = #tpu.dot_dimension_numbers<[1], [0], [0], [1], [0, 0, 1, 1], [], []>} : vector<32x10xbf16>, vector<10x128xbf16>, vector<32x128xf32> -> vector<32x128xf32>
    %c0_29 = arith.constant 0 : index
    %c0_30 = arith.constant 0 : index
    %94 = vector.load %arg7[%c0_29, %c0_30] : memref<32x6xbf16, #tpu.memory_space<vmem>>, vector<32x6xbf16>
    %cst_31 = arith.constant dense<0.000000e+00> : vector<32x128xf32>
    %95 = tpu.matmul %94, %5, %cst_31 {dimension_numbers = #tpu.dot_dimension_numbers<[1], [0], [0], [1], [0, 0, 1, 1], [], []>} : vector<32x6xbf16>, vector<6x128xbf16>, vector<32x128xf32> -> vector<32x128xf32>
    %96 = arith.addf %93, %95 : vector<32x128xf32>
    %c0_32 = arith.constant 0 : index
    %c0_33 = arith.constant 0 : index
    %97 = vector.load %arg8[%c0_32, %c0_33] : memref<32x1xf32, #tpu.memory_space<vmem>>, vector<32x1xf32>
    %98 = vector.broadcast %97 : vector<32x1xf32> to vector<32x128xf32>
    %99 = arith.addf %96, %98 : vector<32x128xf32>
    %cst_34 = arith.constant 0.000000e+00 : f32
    %100 = vector.broadcast %cst_34 : f32 to vector<32x128xf32>
    %101 = arith.maximumf %99, %100 : vector<32x128xf32>
    %c0_35 = arith.constant 0 : index
    %c0_36 = arith.constant 0 : index
    %102 = vector.load %arg9[%c0_35, %c0_36] : memref<16x32xbf16, #tpu.memory_space<vmem>>, vector<16x32xbf16>
    %c0_37 = arith.constant 0 : index
    %c0_38 = arith.constant 0 : index
    %103 = vector.load %arg10[%c0_37, %c0_38] : memref<16x1xf32, #tpu.memory_space<vmem>>, vector<16x1xf32>
    %104 = arith.truncf %101 : vector<32x128xf32> to vector<32x128xbf16>
    %cst_39 = arith.constant dense<0.000000e+00> : vector<16x128xf32>
    %105 = tpu.matmul %102, %104, %cst_39 {dimension_numbers = #tpu.dot_dimension_numbers<[1], [0], [0], [1], [0, 0, 1, 1], [], []>} : vector<16x32xbf16>, vector<32x128xbf16>, vector<16x128xf32> -> vector<16x128xf32>
    %106 = vector.broadcast %103 : vector<16x1xf32> to vector<16x128xf32>
    %107 = arith.addf %105, %106 : vector<16x128xf32>
    %cst_40 = arith.constant 0.000000e+00 : f32
    %108 = vector.broadcast %cst_40 : f32 to vector<16x128xf32>
    %109 = arith.maximumf %107, %108 : vector<16x128xf32>
    %c0_41 = arith.constant 0 : index
    %c0_42 = arith.constant 0 : index
    %c0_43 = arith.constant 0 : index
    %110 = vector.load %arg11[%c0_41, %c0_42, %c0_43] : memref<1x16x128xf32, #tpu.memory_space<vmem>>, vector<1x16x128xf32>
    %111 = vector.shape_cast %110 : vector<1x16x128xf32> to vector<16x128xf32>
    %112 = vector.shape_cast %109 : vector<16x128xf32> to vector<1x16x128xf32>
    tpu.vector_store %arg11[%c0_41, %c0_42, %c0_43], %112 {strides = array<i32>} : memref<1x16x128xf32, #tpu.memory_space<vmem>>, vector<1x16x128xf32>,
    return
  }
  func.func @transform_0(%arg0: i32, %arg1: i32) -> (i32, i32, i32) {
    %c0_i32 = arith.constant 0 : i32
    %c0_i32_0 = arith.constant 0 : i32
    return %arg0, %c0_i32, %arg1 : i32, i32, i32
  }
  func.func @transform_1(%arg0: i32, %arg1: i32) -> (i32, i32, i32) {
    %c0_i32 = arith.constant 0 : i32
    %c0_i32_0 = arith.constant 0 : i32
    %c0_i32_1 = arith.constant 0 : i32
    return %arg0, %c0_i32, %c0_i32_0 : i32, i32, i32
  }
  func.func @transform_2(%arg0: i32, %arg1: i32) -> (i32, i32, i32) {
    %c0_i32 = arith.constant 0 : i32
    %c0_i32_0 = arith.constant 0 : i32
    return %arg0, %c0_i32, %arg1 : i32, i32, i32
  }
  func.func @transform_3(%arg0: i32, %arg1: i32) -> (i32, i32, i32) {
    %c0_i32 = arith.constant 0 : i32
    %c0_i32_0 = arith.constant 0 : i32
    %c0_i32_1 = arith.constant 0 : i32
    return %arg0, %c0_i32, %c0_i32_0 : i32, i32, i32
  }
  func.func @transform_4(%arg0: i32, %arg1: i32) -> (i32, i32) {
    %c0_i32 = arith.constant 0 : i32
    %c0_i32_0 = arith.constant 0 : i32
    %c0_i32_1 = arith.constant 0 : i32
    return %c0_i32, %c0_i32_0 : i32, i32
  }
  func.func @transform_5(%arg0: i32, %arg1: i32) -> (i32, i32) {
    %c0_i32 = arith.constant 0 : i32
    %c0_i32_0 = arith.constant 0 : i32
    %c0_i32_1 = arith.constant 0 : i32
    return %c0_i32, %c0_i32_0 : i32, i32
  }
  func.func @transform_6(%arg0: i32, %arg1: i32) -> (i32, i32) {
    %c0_i32 = arith.constant 0 : i32
    %c0_i32_0 = arith.constant 0 : i32
    %c0_i32_1 = arith.constant 0 : i32
    return %c0_i32, %c0_i32_0 : i32, i32
  }
  func.func @transform_7(%arg0: i32, %arg1: i32) -> (i32, i32) {
    %c0_i32 = arith.constant 0 : i32
    %c0_i32_0 = arith.constant 0 : i32
    %c0_i32_1 = arith.constant 0 : i32
    return %c0_i32, %c0_i32_0 : i32, i32
  }
  func.func @transform_8(%arg0: i32, %arg1: i32) -> (i32, i32) {
    %c0_i32 = arith.constant 0 : i32
    %c0_i32_0 = arith.constant 0 : i32
    %c0_i32_1 = arith.constant 0 : i32
    return %c0_i32, %c0_i32_0 : i32, i32
  }
  func.func @transform_9(%arg0: i32, %arg1: i32) -> (i32, i32, i32) {
    %c0_i32 = arith.constant 0 : i32
    %c0_i32_0 = arith.constant 0 : i32
    return %arg0, %c0_i32, %arg1 : i32, i32, i32
  }
}

</mosaic_0001>

<llo_original>
// kernel: tpu_custom_call.1
$region0: #{tpu_custom_call.1}
  #allocation0 [shape = 'u32[]', space=smem, size = 0x4, offset = 0x4, fixed_abs, tag = 'smem constant byte address 0x4 - core index']
  #allocation1 [shape = 'u32[144,128]{1,0:T(1,128)}', space=vmem, size = 0x12000, scoped, tag = 'internal scratch']
  %s0 = inlined_call_operand.vmem [shape: f32[2,3,128], index: 0, kind: input, shape index: {}]
  %s1 = inlined_call_operand.vmem [shape: f32[2,8,3], index: 1, kind: input, shape index: {}]
  %s2 = inlined_call_operand.vmem [shape: bf16[2,6,128], index: 2, kind: input, shape index: {}]
  %s3 = inlined_call_operand.vmem [shape: bf16[2,10,8], index: 3, kind: input, shape index: {}]
  %s4 = inlined_call_operand.vmem [shape: bf16[32,10], index: 4, kind: input, shape index: {}]
  %s5 = inlined_call_operand.vmem [shape: bf16[32,6], index: 5, kind: input, shape index: {}]
  %s6 = inlined_call_operand.vmem [shape: f32[32,1], index: 6, kind: input, shape index: {}]
  %s7 = inlined_call_operand.vmem [shape: bf16[16,32], index: 7, kind: input, shape index: {}]
  %s8 = inlined_call_operand.vmem [shape: f32[16,1], index: 8, kind: input, shape index: {}]
  %s9 = inlined_call_operand.hbm [shape: f32[2,16,128], index: 9, kind: output, shape index: {}]
  %s10 = sld [smem:[#allocation0]]
  $region69: #{tpu_custom_call.1} parent=0
    _
  %s12 = ssub.s32 1, %s10
  %s13 = scalar_select 0, %s12, %s10
  $region1: #{tpu_custom_call.1} parent=0
    #allocation2 [shape = 'u8[16384]{0}', space=vmem, size = 0x4000, scoped, tag = 'output window, operand 0']
    #allocation3 [shape = 's32[2]{0}', space=sflag, size = 0x8, scoped, tag = 'scoped memory for tpu_custom_call.1']
    %14 = vsyncpa [#allocation3], 0
    %s15 = scalar_lea.sflag [#allocation3], 1
    %16 = vsyncpa %s15, 0
    loop: start=0, step=1, limit=4
    $region2: #{tpu_custom_call.1} parent=1 // loop_pre_header
      _
    $region3: #{tpu_custom_call.1} parent=1 // loop_header
      %s18 = sphi 0, %s22
      %p19 = scmp.ge.s32.totalorder %s18, 4
      %s25 = sphi 0, %s37
      %s26 = sphi 0, %s33
      %s27 = sphi 0, %s25
      %s28 = sphi 0, %s26
      %s29 = sphi 0, %s27
      %s30 = sphi 0, %s28
      %s42 = sphi 0, %s44
      %s45 = sphi 0, %s42
      %s46 = sphi 0, %s45
      %s62 = sphi 0, %s46
      %s68 = sphi 0, %s70
      %s71 = sphi 0, %s68
      %s72 = sphi 0, %s71
      %s88 = sphi 0, %s72
      %s96 = sphi 0, %s98
      %s99 = sphi 0, %s96
      %s100 = sphi 0, %s99
      %s116 = sphi 0, %s100
      %s122 = sphi 0, %s124
      %s125 = sphi 0, %s122
      %s126 = sphi 0, %s125
      %s142 = sphi 0, %s126
      %s146 = sphi 0, %s146
      %s148 = sphi 0, %s146
      %s149 = sphi 0, %s148
      %s163 = sphi 0, %s149
      %s167 = sphi 0, %s167
      %s169 = sphi 0, %s167
      %s170 = sphi 0, %s169
      %s184 = sphi 0, %s170
      %s188 = sphi 0, %s188
      %s190 = sphi 0, %s188
      %s191 = sphi 0, %s190
      %s205 = sphi 0, %s191
      %s209 = sphi 0, %s209
      %s211 = sphi 0, %s209
      %s212 = sphi 0, %s211
      %s226 = sphi 0, %s212
      %s230 = sphi 0, %s230
      %s232 = sphi 0, %s230
      %s233 = sphi 0, %s232
      %s247 = sphi 0, %s233
      %s255 = sphi 0, %s257
      %s258 = sphi 0, %s255
      %s259 = sphi 0, %s258
      %s275 = sphi 0, %s259
    $region4: #{tpu_custom_call.1} parent=1 // loop_header_branch
      %21 = sbr.rel (%p19) target = $region8
    $region5: #{tpu_custom_call.1} parent=1 // loop_body
      %s23 = ssub.s32 %s18, 1
      %s24 = ssub.s32 %s18, 2
      %s31 = sadd.s32 1, %s26
      %p32 = scmp.ge.s32.totalorder %s31, 1
      %s33 = scalar_select %p32, 0, %s31
      %s34 = sadd.s32 1, %s25
      %s35 = scalar_select %p32, %s34, %s25
      %p36 = scmp.ge.s32.totalorder %s35, 2
      %s37 = scalar_select %p36, 0, %s35
      %s38 = ssub.s32 %s25, %s37
      %s39 = ssub.s32 %s26, %s33
      %s40 = sor.u32 %s38, %s39
      %p41 = scmp.eq.s32.totalorder %s40, 0
      %s43 = sadd.s32 %s42, 1
      %s44 = scalar_select %p41, %s42, %s43
      %p47 = pneg %p41
      %p48 = scmp.eq.s32.totalorder %s18, 1
      %p49 = por %p47, %p48
      %p50 = scmp.ne.s32.totalorder %s42, %s45
      %p51 = scmp.eq.s32.totalorder %s18, 0
      %p52 = por %p50, %p51
      %p53 = scmp.ne.s32.totalorder %s42, %s45
      %p54 = scmp.eq.s32.totalorder %s23, 1
      %p55 = por %p53, %p54
      %p56 = scmp.ne.s32.totalorder %s45, %s46
      %p57 = scmp.eq.s32.totalorder %s23, 0
      %p58 = por %p56, %p57
      %p59 = scmp.ne.s32.totalorder %s45, %s46
      %p60 = scmp.eq.s32.totalorder %s24, 1
      %p61 = por %p59, %p60
      %p63 = scmp.ne.s32.totalorder %s46, %s62
      %p64 = scmp.eq.s32.totalorder %s24, 0
      %p65 = por %p63, %p64
      %s66 = ssub.s32 %s25, %s37
      %p67 = scmp.eq.s32.totalorder %s66, 0
      %s69 = sadd.s32 %s68, 1
      %s70 = scalar_select %p67, %s68, %s69
      %p73 = pneg %p67
      %p74 = scmp.eq.s32.totalorder %s18, 1
      %p75 = por %p73, %p74
      %p76 = scmp.ne.s32.totalorder %s68, %s71
      %p77 = scmp.eq.s32.totalorder %s18, 0
      %p78 = por %p76, %p77
      %p79 = scmp.ne.s32.totalorder %s68, %s71
      %p80 = scmp.eq.s32.totalorder %s23, 1
      %p81 = por %p79, %p80
      %p82 = scmp.ne.s32.totalorder %s71, %s72
      %p83 = scmp.eq.s32.totalorder %s23, 0
      %p84 = por %p82, %p83
      %p85 = scmp.ne.s32.totalorder %s71, %s72
      %p86 = scmp.eq.s32.totalorder %s24, 1
      %p87 = por %p85, %p86
      %p89 = scmp.ne.s32.totalorder %s72, %s88
      %p90 = scmp.eq.s32.totalorder %s24, 0
      %p91 = por %p89, %p90
      %s92 = ssub.s32 %s25, %s37
      %s93 = ssub.s32 %s26, %s33
      %s94 = sor.u32 %s92, %s93
      %p95 = scmp.eq.s32.totalorder %s94, 0
      %s97 = sadd.s32 %s96, 1
      %s98 = scalar_select %p95, %s96, %s97
      %p101 = pneg %p95
      %p102 = scmp.eq.s32.totalorder %s18, 1
      %p103 = por %p101, %p102
      %p104 = scmp.ne.s32.totalorder %s96, %s99
      %p105 = scmp.eq.s32.totalorder %s18, 0
      %p106 = por %p104, %p105
      %p107 = scmp.ne.s32.totalorder %s96, %s99
      %p108 = scmp.eq.s32.totalorder %s23, 1
      %p109 = por %p107, %p108
      %p110 = scmp.ne.s32.totalorder %s99, %s100
      %p111 = scmp.eq.s32.totalorder %s23, 0
      %p112 = por %p110, %p111
      %p113 = scmp.ne.s32.totalorder %s99, %s100
      %p114 = scmp.eq.s32.totalorder %s24, 1
      %p115 = por %p113, %p114
      %p117 = scmp.ne.s32.totalorder %s100, %s116
      %p118 = scmp.eq.s32.totalorder %s24, 0
      %p119 = por %p117, %p118
      %s120 = ssub.s32 %s25, %s37
      %p121 = scmp.eq.s32.totalorder %s120, 0
      %s123 = sadd.s32 %s122, 1
      %s124 = scalar_select %p121, %s122, %s123
      %p127 = pneg %p121
      %p128 = scmp.eq.s32.totalorder %s18, 1
      %p129 = por %p127, %p128
      %p130 = scmp.ne.s32.totalorder %s122, %s125
      %p131 = scmp.eq.s32.totalorder %s18, 0
      %p132 = por %p130, %p131
      %p133 = scmp.ne.s32.totalorder %s122, %s125
      %p134 = scmp.eq.s32.totalorder %s23, 1
      %p135 = por %p133, %p134
      %p136 = scmp.ne.s32.totalorder %s125, %s126
      %p137 = scmp.eq.s32.totalorder %s23, 0
      %p138 = por %p136, %p137
      %p139 = scmp.ne.s32.totalorder %s125, %s126
      %p140 = scmp.eq.s32.totalorder %s24, 1
      %p141 = por %p139, %p140
      %p143 = scmp.ne.s32.totalorder %s126, %s142
      %p144 = scmp.eq.s32.totalorder %s24, 0
      %p145 = por %p143, %p144
      %s147 = sadd.s32 %s146, 1
      %p150 = scmp.eq.s32.totalorder %s18, 1
      %p151 = scmp.ne.s32.totalorder %s146, %s148
      %p152 = scmp.eq.s32.totalorder %s18, 0
      %p153 = por %p151, %p152
      %p154 = scmp.ne.s32.totalorder %s146, %s148
      %p155 = scmp.eq.s32.totalorder %s23, 1
      %p156 = por %p154, %p155
      %p157 = scmp.ne.s32.totalorder %s148, %s149
      %p158 = scmp.eq.s32.totalorder %s23, 0
      %p159 = por %p157, %p158
      %p160 = scmp.ne.s32.totalorder %s148, %s149
      %p161 = scmp.eq.s32.totalorder %s24, 1
      %p162 = por %p160, %p161
      %p164 = scmp.ne.s32.totalorder %s149, %s163
      %p165 = scmp.eq.s32.totalorder %s24, 0
      %p166 = por %p164, %p165
      %s168 = sadd.s32 %s167, 1
      %p171 = scmp.eq.s32.totalorder %s18, 1
      %p172 = scmp.ne.s32.totalorder %s167, %s169
      %p173 = scmp.eq.s32.totalorder %s18, 0
      %p174 = por %p172, %p173
      %p175 = scmp.ne.s32.totalorder %s167, %s169
      %p176 = scmp.eq.s32.totalorder %s23, 1
      %p177 = por %p175, %p176
      %p178 = scmp.ne.s32.totalorder %s169, %s170
      %p179 = scmp.eq.s32.totalorder %s23, 0
      %p180 = por %p178, %p179
      %p181 = scmp.ne.s32.totalorder %s169, %s170
      %p182 = scmp.eq.s32.totalorder %s24, 1
      %p183 = por %p181, %p182
      %p185 = scmp.ne.s32.totalorder %s170, %s184
      %p186 = scmp.eq.s32.totalorder %s24, 0
      %p187 = por %p185, %p186
      %s189 = sadd.s32 %s188, 1
      %p192 = scmp.eq.s32.totalorder %s18, 1
      %p193 = scmp.ne.s32.totalorder %s188, %s190
      %p194 = scmp.eq.s32.totalorder %s18, 0
      %p195 = por %p193, %p194
      %p196 = scmp.ne.s32.totalorder %s188, %s190
      %p197 = scmp.eq.s32.totalorder %s23, 1
      %p198 = por %p196, %p197
      %p199 = scmp.ne.s32.totalorder %s190, %s191
      %p200 = scmp.eq.s32.totalorder %s23, 0
      %p201 = por %p199, %p200
      %p202 = scmp.ne.s32.totalorder %s190, %s191
      %p203 = scmp.eq.s32.totalorder %s24, 1
      %p204 = por %p202, %p203
      %p206 = scmp.ne.s32.totalorder %s191, %s205
      %p207 = scmp.eq.s32.totalorder %s24, 0
      %p208 = por %p206, %p207
      %s210 = sadd.s32 %s209, 1
      %p213 = scmp.eq.s32.totalorder %s18, 1
      %p214 = scmp.ne.s32.totalorder %s209, %s211
      %p215 = scmp.eq.s32.totalorder %s18, 0
      %p216 = por %p214, %p215
      %p217 = scmp.ne.s32.totalorder %s209, %s211
      %p218 = scmp.eq.s32.totalorder %s23, 1
      %p219 = por %p217, %p218
      %p220 = scmp.ne.s32.totalorder %s211, %s212
      %p221 = scmp.eq.s32.totalorder %s23, 0
      %p222 = por %p220, %p221
      %p223 = scmp.ne.s32.totalorder %s211, %s212
      %p224 = scmp.eq.s32.totalorder %s24, 1
      %p225 = por %p223, %p224
      %p227 = scmp.ne.s32.totalorder %s212, %s226
      %p228 = scmp.eq.s32.totalorder %s24, 0
      %p229 = por %p227, %p228
      %s231 = sadd.s32 %s230, 1
      %p234 = scmp.eq.s32.totalorder %s18, 1
      %p235 = scmp.ne.s32.totalorder %s230, %s232
      %p236 = scmp.eq.s32.totalorder %s18, 0
      %p237 = por %p235, %p236
      %p238 = scmp.ne.s32.totalorder %s230, %s232
      %p239 = scmp.eq.s32.totalorder %s23, 1
      %p240 = por %p238, %p239
      %p241 = scmp.ne.s32.totalorder %s232, %s233
      %p242 = scmp.eq.s32.totalorder %s23, 0
      %p243 = por %p241, %p242
      %p244 = scmp.ne.s32.totalorder %s232, %s233
      %p245 = scmp.eq.s32.totalorder %s24, 1
      %p246 = por %p244, %p245
      %p248 = scmp.ne.s32.totalorder %s233, %s247
      %p249 = scmp.eq.s32.totalorder %s24, 0
      %p250 = por %p248, %p249
      %s251 = ssub.s32 %s25, %s37
      %s252 = ssub.s32 %s26, %s33
      %s253 = sor.u32 %s251, %s252
      %p254 = scmp.eq.s32.totalorder %s253, 0
      %s256 = sadd.s32 %s255, 1
      %s257 = scalar_select %p254, %s255, %s256
      %p260 = pneg %p254
      %p261 = scmp.eq.s32.totalorder %s18, 1
      %p262 = por %p260, %p261
      %p263 = scmp.ne.s32.totalorder %s255, %s258
      %p264 = scmp.eq.s32.totalorder %s18, 0
      %p265 = por %p263, %p264
      %p266 = scmp.ne.s32.totalorder %s255, %s258
      %p267 = scmp.eq.s32.totalorder %s23, 1
      %p268 = por %p266, %p267
      %p269 = scmp.ne.s32.totalorder %s258, %s259
      %p270 = scmp.eq.s32.totalorder %s23, 0
      %p271 = por %p269, %p270
      %p272 = scmp.ne.s32.totalorder %s258, %s259
      %p273 = scmp.eq.s32.totalorder %s24, 1
      %p274 = por %p272, %p273
      %p276 = scmp.ne.s32.totalorder %s259, %s275
      %p277 = scmp.eq.s32.totalorder %s24, 0
      %p278 = por %p276, %p277
      %p279 = scmp.le.s32.totalorder 1, %s18
      %p280 = scmp.lt.s32.totalorder %s18, 3
      %p281 = pnand %p279, %p280
      %p282 = pneg %p281
      // Predicated region
      $region9: #{tpu_custom_call.1} parent=5 // pred_check
        _
      $region10: #{tpu_custom_call.1} parent=5 // pred_check_branch
        %284 = sbr.rel (%p281) target = $region12
      $region11: #{tpu_custom_call.1} parent=5 // pred_region
        %s285 = ssub.s32 %s18, 1
        // Predicated region
        $region13: #{tpu_custom_call.1} parent=11 // pred_check
          %p286 = pneg %p159
        $region14: #{tpu_custom_call.1} parent=11 // pred_check_branch
          %288 = sbr.rel (%p286) target = $region16
        $region15: #{tpu_custom_call.1} parent=11 // pred_region
          _
        $region16: #{tpu_custom_call.1} parent=11 // pred_fallthru
          _
        // Predicated region
        $region17: #{tpu_custom_call.1} parent=11 // pred_check
          %p289 = pneg %p180
        $region18: #{tpu_custom_call.1} parent=11 // pred_check_branch
          %291 = sbr.rel (%p289) target = $region20
        $region19: #{tpu_custom_call.1} parent=11 // pred_region
          _
        $region20: #{tpu_custom_call.1} parent=11 // pred_fallthru
          _
        // Predicated region
        $region21: #{tpu_custom_call.1} parent=11 // pred_check
          %p292 = pneg %p201
        $region22: #{tpu_custom_call.1} parent=11 // pred_check_branch
          %294 = sbr.rel (%p292) target = $region24
        $region23: #{tpu_custom_call.1} parent=11 // pred_region
          _
        $region24: #{tpu_custom_call.1} parent=11 // pred_fallthru
          _
        // Predicated region
        $region25: #{tpu_custom_call.1} parent=11 // pred_check
          %p295 = pneg %p222
        $region26: #{tpu_custom_call.1} parent=11 // pred_check_branch
          %297 = sbr.rel (%p295) target = $region28
        $region27: #{tpu_custom_call.1} parent=11 // pred_region
          _
        $region28: #{tpu_custom_call.1} parent=11 // pred_fallthru
          _
        // Predicated region
        $region29: #{tpu_custom_call.1} parent=11 // pred_check
          %p298 = pneg %p243
        $region30: #{tpu_custom_call.1} parent=11 // pred_check_branch
          %300 = sbr.rel (%p298) target = $region32
        $region31: #{tpu_custom_call.1} parent=11 // pred_region
          _
        $region32: #{tpu_custom_call.1} parent=11 // pred_fallthru
          _
      $region12: #{tpu_custom_call.1} parent=5 // pred_fallthru
        _
      %p301 = scmp.lt.s32.totalorder %s18, 2
      // Predicated region
      $region33: #{tpu_custom_call.1} parent=5 // pred_check
        %p302 = pneg %p301
      $region34: #{tpu_custom_call.1} parent=5 // pred_check_branch
        %304 = sbr.rel (%p302) target = $region36
      $region35: #{tpu_custom_call.1} parent=5 // pred_region
        // Predicated region
        $region37: #{tpu_custom_call.1} parent=35 // pred_check
          %p305 = pneg %p52
        $region38: #{tpu_custom_call.1} parent=35 // pred_check_branch
          %307 = sbr.rel (%p305) target = $region40
        $region39: #{tpu_custom_call.1} parent=35 // pred_region
          %p308 = scmp.lt.s32.totalorder %s25, 1
          %s309 = scalar_select %p308, %s25, 1
          %p310 = scmp.lt.s32.totalorder %s26, 0
          %s311 = scalar_select %p310, %s26, 0
          %s312 = sadd.s32 %s311, %s309
          %s313 = smul.addr %s312, 4
          %s314 = scalar_lea.vmem %s0, %s313
        $region40: #{tpu_custom_call.1} parent=35 // pred_fallthru
          _
        // Predicated region
        $region41: #{tpu_custom_call.1} parent=35 // pred_check
          %p315 = pneg %p78
        $region42: #{tpu_custom_call.1} parent=35 // pred_check_branch
          %317 = sbr.rel (%p315) target = $region44
        $region43: #{tpu_custom_call.1} parent=35 // pred_region
          %p318 = scmp.lt.s32.totalorder %s25, 1
          %s319 = scalar_select %p318, %s25, 1
          %s320 = smul.addr %s319, 8
          %s321 = scalar_lea.vmem %s1, %s320
        $region44: #{tpu_custom_call.1} parent=35 // pred_fallthru
          _
        // Predicated region
        $region45: #{tpu_custom_call.1} parent=35 // pred_check
          %p322 = pneg %p106
        $region46: #{tpu_custom_call.1} parent=35 // pred_check_branch
          %324 = sbr.rel (%p322) target = $region48
        $region47: #{tpu_custom_call.1} parent=35 // pred_region
          %p325 = scmp.lt.s32.totalorder %s25, 1
          %s326 = scalar_select %p325, %s25, 1
          %p327 = scmp.lt.s32.totalorder %s26, 0
          %s328 = scalar_select %p327, %s26, 0
          %s329 = sadd.s32 %s328, %s326
          %s330 = smul.addr %s329, 4
          %s331 = scalar_lea.vmem %s2, %s330
        $region48: #{tpu_custom_call.1} parent=35 // pred_fallthru
          _
        // Predicated region
        $region49: #{tpu_custom_call.1} parent=35 // pred_check
          %p332 = pneg %p132
        $region50: #{tpu_custom_call.1} parent=35 // pred_check_branch
          %334 = sbr.rel (%p332) target = $region52
        $region51: #{tpu_custom_call.1} parent=35 // pred_region
          %p335 = scmp.lt.s32.totalorder %s25, 1
          %s336 = scalar_select %p335, %s25, 1
          %s337 = smul.addr %s336, 2
          %s338 = smul.addr %s337, 4
          %s339 = scalar_lea.vmem %s3, %s338
        $region52: #{tpu_custom_call.1} parent=35 // pred_fallthru
          _
      $region36: #{tpu_custom_call.1} parent=5 // pred_fallthru
        _
      %p340 = scmp.le.s32.totalorder 1, %s18
      %p341 = scmp.lt.s32.totalorder %s18, 3
      %p342 = pnand %p340, %p341
      %p343 = pneg %p342
      // Predicated region
      $region53: #{tpu_custom_call.1} parent=5 // pred_check
        _
      $region54: #{tpu_custom_call.1} parent=5 // pred_check_branch
        %345 = sbr.rel (%p342) target = $region56
      $region55: #{tpu_custom_call.1} parent=5 // pred_region
        %s346 = ssub.s32 %s18, 1
        %p347 = scmp.lt.s32.totalorder %s27, 1
        %s348 = scalar_select %p347, %s27, 1
        %p349 = scmp.lt.s32.totalorder %s28, 0
        %s350 = scalar_select %p349, %s28, 0
        %s351 = sadd.s32 %s350, %s348
        %s352 = smul.addr %s351, 4
        %s353 = scalar_lea.vmem %s0, %s352
        %p354 = pneg %p58
        %p355 = pneg %p55
        %p356 = scmp.lt.s32.totalorder %s27, 1
        %s357 = scalar_select %p356, %s27, 1
        %s358 = smul.addr %s357, 8
        %s359 = scalar_lea.vmem %s1, %s358
        %p360 = pneg %p84
        %p361 = pneg %p81
        %p362 = scmp.lt.s32.totalorder %s27, 1
        %s363 = scalar_select %p362, %s27, 1
        %p364 = scmp.lt.s32.totalorder %s28, 0
        %s365 = scalar_select %p364, %s28, 0
        %s366 = sadd.s32 %s365, %s363
        %s367 = smul.addr %s366, 4
        %s368 = scalar_lea.vmem %s2, %s367
        %p369 = pneg %p112
        %p370 = pneg %p109
        %p371 = scmp.lt.s32.totalorder %s27, 1
        %s372 = scalar_select %p371, %s27, 1
        %s373 = smul.addr %s372, 2
        %s374 = smul.addr %s373, 4
        %s375 = scalar_lea.vmem %s3, %s374
        %p376 = pneg %p138
        %p377 = pneg %p135
        %p378 = pneg %p159
        %p379 = pneg %p156
        %p380 = pneg %p180
        %p381 = pneg %p177
        %p382 = pneg %p201
        %p383 = pneg %p198
        %p384 = pneg %p222
        %p385 = pneg %p219
        %p386 = pneg %p243
        %p387 = pneg %p240
        %p388 = pneg %p271
        %p389 = pneg %p268
        %s390 = sand.u32 %s258, 1
        %s391 = scalar_lea.sflag [#allocation3], %s390
        %s392 = sand.u32 %s258, 1
        %s393 = smul.addr %s392, 16
        %s394 = scalar_lea.vmem [#allocation2], %s393
        %p395 = scmp.lt.s32.totalorder %s27, 1
        %s396 = scalar_select %p395, %s27, 1
        %p397 = scmp.lt.s32.totalorder %s28, 0
        %s398 = scalar_select %p397, %s28, 0
        %s399 = sadd.s32 %s398, %s396
        %s400 = smul.addr %s399, 4
        %s401 = scalar_lea.vmem %s0, %s400
        %p402 = scmp.lt.s32.totalorder %s27, 1
        %s403 = scalar_select %p402, %s27, 1
        %s404 = smul.addr %s403, 8
        %s405 = scalar_lea.vmem %s1, %s404
        %p406 = scmp.lt.s32.totalorder %s27, 1
        %s407 = scalar_select %p406, %s27, 1
        %p408 = scmp.lt.s32.totalorder %s28, 0
        %s409 = scalar_select %p408, %s28, 0
        %s410 = sadd.s32 %s409, %s407
        %s411 = smul.addr %s410, 4
        %s412 = scalar_lea.vmem %s2, %s411
        %p413 = scmp.lt.s32.totalorder %s27, 1
        %s414 = scalar_select %p413, %s27, 1
        %s415 = smul.addr %s414, 2
        %s416 = smul.addr %s415, 4
        %s417 = scalar_lea.vmem %s3, %s416
        %v419 = vld [vmem:[%s401] sm:$0x7]
        %v420 = vld [vmem:[%s405] sm:$0xff]
        %v421 = vld [vmem:[%s412] sm:$0x7]
        %v422 = vld [vmem:[%s417] sm:$0xf]
        %v423 = vld [vmem:[%s417 + $0x4] sm:$0x1]
        %425 = vset.pattern.permute.xlu0 0
        %426 = vperm.xlu0 %425, %v420
        %v427 = vpop.permute.xlu0 %426
        %v429 = vlaneseq
        %v430 = vshrl.u32 %v429, 7
        %v431 = vsub.s32 0, %v430
        %v432 = vrot.slane %v419, %v431
        %v433 = vsub.f32 %v427, %v432
        %v434 = vmul.f32 %v433, %v433
        %435 = vset.pattern.permute.xlu0 1
        %436 = vperm.xlu0 %435, %v420
        %v437 = vpop.permute.xlu0 %436
        %v439 = vlaneseq
        %v440 = vshrl.u32 %v439, 7
        %v441 = vsub.s32 1, %v440
        %v442 = vrot.slane %v419, %v441
        %v443 = vsub.f32 %v437, %v442
        %v444 = vmul.f32 %v443, %v443
        %v445 = vadd.f32 %v434, %v444
        %446 = vset.pattern.permute.xlu0 2
        %447 = vperm.xlu0 %446, %v420
        %v448 = vpop.permute.xlu0 %447
        %v450 = vlaneseq
        %v451 = vshrl.u32 %v450, 7
        %v452 = vsub.s32 2, %v451
        %v453 = vrot.slane %v419, %v452
        %v454 = vsub.f32 %v448, %v453
        %v455 = vmul.f32 %v454, %v454
        %v456 = vadd.f32 %v445, %v455
        %v457 = vlaneseq
        %v458 = vshrl.u32 %v457, 7
        %v459 = vrot.slane %v456, 4
        %v460 = vmin.f32 %v456, %v459
        %v461 = vrot.slane %v460, 2
        %v462 = vmin.f32 %v460, %v461
        %v463 = vrot.slane %v462, 1
        %v464 = vmin.f32 %v462, %v463
        %vm465 = vcmp.eq.f32.partialorder %v456, %v464
        %v466 = vsel %vm465, %v458, 8
        %v467 = vrot.slane %v466, 4
        %vm468 = vcmp.lt.s32.totalorder %v466, %v467
        %v469 = vsel %vm468, %v466, %v467
        %v470 = vrot.slane %v469, 2
        %vm471 = vcmp.lt.s32.totalorder %v469, %v470
        %v472 = vsel %vm471, %v469, %v470
        %v473 = vrot.slane %v472, 1
        %vm474 = vcmp.lt.s32.totalorder %v472, %v473
        %v475 = vsel %vm474, %v472, %v473
        %vm476 = vcmp.eq.s32.totalorder %v458, %v475
        %v477 = vsel %vm476, inf, %v456
        %v478 = vrot.slane %v477, 4
        %v479 = vmin.f32 %v477, %v478
        %v480 = vrot.slane %v479, 2
        %v481 = vmin.f32 %v479, %v480
        %v482 = vrot.slane %v481, 1
        %v483 = vmin.f32 %v481, %v482
        %vm484 = vcmp.eq.f32.partialorder %v477, %v483
        %v485 = vsel %vm484, %v458, 8
        %v486 = vrot.slane %v485, 4
        %vm487 = vcmp.lt.s32.totalorder %v485, %v486
        %v488 = vsel %vm487, %v485, %v486
        %v489 = vrot.slane %v488, 2
        %vm490 = vcmp.lt.s32.totalorder %v488, %v489
        %v491 = vsel %vm490, %v488, %v489
        %v492 = vrot.slane %v491, 1
        %vm493 = vcmp.lt.s32.totalorder %v491, %v492
        %v494 = vsel %vm493, %v491, %v492
        %vm495 = vcmp.eq.s32.totalorder %v458, %v494
        %v496 = vsel %vm495, inf, %v477
        %v497 = vrot.slane %v496, 4
        %v498 = vmin.f32 %v496, %v497
        %v499 = vrot.slane %v498, 2
        %v500 = vmin.f32 %v498, %v499
        %v501 = vrot.slane %v500, 1
        %v502 = vmin.f32 %v500, %v501
        %vm503 = vcmp.eq.f32.partialorder %v496, %v502
        %v504 = vsel %vm503, %v458, 8
        %v505 = vrot.slane %v504, 4
        %vm506 = vcmp.lt.s32.totalorder %v504, %v505
        %v507 = vsel %vm506, %v504, %v505
        %v508 = vrot.slane %v507, 2
        %vm509 = vcmp.lt.s32.totalorder %v507, %v508
        %v510 = vsel %vm509, %v507, %v508
        %v511 = vrot.slane %v510, 1
        %vm512 = vcmp.lt.s32.totalorder %v510, %v511
        %v513 = vsel %vm512, %v510, %v511
        %vm514 = vcmp.eq.s32.totalorder %v458, %v513
        %v515 = vadd.f32 %v464, 1e-08
        %v516 = vrcp.pop %v515
        %v517 = vadd.f32 %v483, 1e-08
        %v518 = vrcp.pop %v517
        %v519 = vadd.f32 %v502, 1e-08
        %v520 = vrcp.pop %v519
        %v521 = vadd.f32 %v516, %v518
        %v522 = vadd.f32 %v521, %v520
        %v523 = vrcp.pop %v522
        %v524 = vmul.f32 1.0, %v523
        %v525 = vmul.f32 %v516, %v524
        %v526 = vmul.f32 %v518, %v524
        %v527 = vmul.f32 %v520, %v524
        %v528 = vsel %vm514, %v527, 0.0
        %v529 = vsel %vm495, %v526, %v528
        %v530 = vsel %vm476, %v525, %v529
        %v531 = vpack.c.bf16 %v530, %v530
        %v534 = vunpack.c.l.b16 %v422
        %v535 = vunpack.c.l.b16 %v423
        %v536 = vpack.c.b16 %v535, %v534
        %vm537 = vcmask 64512
        %v539 = vsel %vm537, %v536, 0
        %vm541 = vcmask 1043456
        %v543 = vsel %vm541, %v531, 0
        %545 = vmatprep.subr.bf16.mxu0 0
        %546 = vmatpush1.bf16.msra.mxu0 %v543
        %547 = vmatprep.subr.bf16.mxu0 0
        %548 = vmatpush1.bf16.msra.mxu0 0
        %549 = vmatprep.subr.bf16.mxu0 0
        %550 = vmatpush1.bf16.msra.mxu0 0
        %551 = vmatprep.subr.bf16.mxu0 0
        %552 = vmatpush1.bf16.msra.mxu0 0
        %553 = vmatprep.subr.bf16.mxu0 0
        %554 = vmatpush1.bf16.msra.mxu0 0
        %555 = vmatprep.subr.bf16.mxu0 0
        %556 = vmatpush1.bf16.msra.mxu0 0
        %557 = vmatprep.subr.bf16.mxu0 0
        %558 = vmatpush1.bf16.msra.mxu0 0
        %559 = vmatprep.subr.bf16.mxu0 0
        %560 = vmatpush1.bf16.msra.mxu0 0
        %561 = vmatprep.subr.bf16.mxu0 0
        %562 = vmatpush1.bf16.msra.mxu0 0
        %563 = vmatprep.subr.bf16.mxu0 0
        %564 = vmatpush1.bf16.msra.mxu0 0
        %565 = vmatprep.subr.bf16.mxu0 0
        %566 = vmatpush1.bf16.msra.mxu0 0
        %567 = vmatprep.subr.bf16.mxu0 0
        %568 = vmatpush1.bf16.msra.mxu0 0
        %569 = vmatprep.subr.bf16.mxu0 0
        %570 = vmatpush1.bf16.msra.mxu0 0
        %571 = vmatprep.subr.bf16.mxu0 0
        %572 = vmatpush1.bf16.msra.mxu0 0
        %573 = vmatprep.subr.bf16.mxu0 0
        %574 = vmatpush1.bf16.msra.mxu0 0
        %575 = vmatprep.subr.bf16.mxu0 0
        %576 = vmatpush1.bf16.msra.mxu0 0
        %577 = vmatprep.mubr.bf16.mxu0 0
        %578 = vmatmul.mubr.bf16.gmra.mrb[0].mxu0 %v539
        %v579 = vpop.f32.mrb[0].mxu0
        %v580 = vadd.f32 0.0, %v579
        %v581 = vpop.f32.mrb[0].mxu0
        %v582 = vpop.f32.mrb[0].mxu0
        %v583 = vadd.f32 0.0, %v582
        %v584 = vpop.f32.mrb[0].mxu0
        %585 = vdwg.mxu0
        %v586 = vld [vmem:[%s4] sm:$0xf]
        %v587 = vld [vmem:[%s4 + $0x4] sm:$0xf]
        %v588 = vld [vmem:[%s4 + $0x8] sm:$0xf]
        %v589 = vld [vmem:[%s4 + $0xc] sm:$0xf]
        %v590 = vpack.c.bf16 %v583, %v580
        %v591 = vld [vmem:[%s5] sm:$0xf]
        %v592 = vld [vmem:[%s5 + $0x4] sm:$0xf]
        %v593 = vld [vmem:[%s5 + $0x8] sm:$0xf]
        %v594 = vld [vmem:[%s5 + $0xc] sm:$0xf]
        %v599 = vunpack.c.l.b16 %v591
        %v600 = vunpack.c.l.b16 %v592
        %v601 = vunpack.c.l.b16 %v593
        %v602 = vunpack.c.l.b16 %v594
        %v603 = vpack.c.b16 %v600, %v599
        %v604 = vpack.c.b16 %v602, %v601
        %vm605 = vcmask 48128
        %v607 = vsel %vm605, %v603, 0
        %v610 = vsel %vm605, %v604, 0
        %vm612 = vcmask 1042432
        %v614 = vsel %vm612, %v421, 0
        %616 = vmatprep.subr.bf16.mxu0 0
        %617 = vmatpush1.bf16.msra.mxu0 %v614
        %618 = vmatprep.subr.bf16.mxu0 0
        %619 = vmatpush1.bf16.msra.mxu0 0
        %620 = vmatprep.subr.bf16.mxu0 0
        %621 = vmatpush1.bf16.msra.mxu0 0
        %622 = vmatprep.subr.bf16.mxu0 0
        %623 = vmatpush1.bf16.msra.mxu0 0
        %624 = vmatprep.subr.bf16.mxu0 0
        %625 = vmatpush1.bf16.msra.mxu0 0
        %626 = vmatprep.subr.bf16.mxu0 0
        %627 = vmatpush1.bf16.msra.mxu0 0
        %628 = vmatprep.subr.bf16.mxu0 0
        %629 = vmatpush1.bf16.msra.mxu0 0
        %630 = vmatprep.subr.bf16.mxu0 0
        %631 = vmatpush1.bf16.msra.mxu0 0
        %632 = vmatprep.subr.bf16.mxu0 0
        %633 = vmatpush1.bf16.msra.mxu0 0
        %634 = vmatprep.subr.bf16.mxu0 0
        %635 = vmatpush1.bf16.msra.mxu0 0
        %636 = vmatprep.subr.bf16.mxu0 0
        %637 = vmatpush1.bf16.msra.mxu0 0
        %638 = vmatprep.subr.bf16.mxu0 0
        %639 = vmatpush1.bf16.msra.mxu0 0
        %640 = vmatprep.subr.bf16.mxu0 0
        %641 = vmatpush1.bf16.msra.mxu0 0
        %642 = vmatprep.subr.bf16.mxu0 0
        %643 = vmatpush1.bf16.msra.mxu0 0
        %644 = vmatprep.subr.bf16.mxu0 0
        %645 = vmatpush1.bf16.msra.mxu0 0
        %646 = vmatprep.subr.bf16.mxu0 0
        %647 = vmatpush1.bf16.msra.mxu0 0
        %648 = vmatprep.mubr.bf16.mxu0 0
        %649 = vmatmul.mubr.bf16.gmra.mrb[0].mxu0 %v607
        %v650 = vpop.f32.mrb[0].mxu0
        %v651 = vadd.f32 0.0, %v650
        %v652 = vpop.f32.mrb[0].mxu0
        %v653 = vpop.f32.mrb[0].mxu0
        %v654 = vadd.f32 0.0, %v653
        %v655 = vpop.f32.mrb[0].mxu0
        %656 = vmatprep.mubr.bf16.mxu0 0
        %657 = vmatmul.mubr.bf16.gmra.mrb[0].mxu0 %v610
        %v658 = vpop.f32.mrb[0].mxu0
        %v659 = vadd.f32 0.0, %v658
        %v660 = vpop.f32.mrb[0].mxu0
        %v661 = vpop.f32.mrb[0].mxu0
        %v662 = vadd.f32 0.0, %v661
        %v663 = vpop.f32.mrb[0].mxu0
        %664 = vdwg.mxu0
        %v669 = vunpack.c.l.b16 %v586
        %v670 = vunpack.c.l.b16 %v587
        %v671 = vunpack.c.l.b16 %v588
        %v672 = vunpack.c.l.b16 %v589
        %v673 = vpack.c.b16 %v670, %v669
        %v674 = vpack.c.b16 %v672, %v671
        %vm675 = vcmask 80896
        %v677 = vsel %vm675, %v673, 0
        %v680 = vsel %vm675, %v674, 0
        %vm682 = vcmask 1044480
        %v684 = vsel %vm682, %v590, 0
        %686 = vmatprep.subr.bf16.mxu0 0
        %687 = vmatpush1.bf16.msra.mxu0 %v684
        %688 = vmatprep.subr.bf16.mxu0 0
        %689 = vmatpush1.bf16.msra.mxu0 0
        %690 = vmatprep.subr.bf16.mxu0 0
        %691 = vmatpush1.bf16.msra.mxu0 0
        %692 = vmatprep.subr.bf16.mxu0 0
        %693 = vmatpush1.bf16.msra.mxu0 0
        %694 = vmatprep.subr.bf16.mxu0 0
        %695 = vmatpush1.bf16.msra.mxu0 0
        %696 = vmatprep.subr.bf16.mxu0 0
        %697 = vmatpush1.bf16.msra.mxu0 0
        %698 = vmatprep.subr.bf16.mxu0 0
        %699 = vmatpush1.bf16.msra.mxu0 0
        %700 = vmatprep.subr.bf16.mxu0 0
        %701 = vmatpush1.bf16.msra.mxu0 0
        %702 = vmatprep.subr.bf16.mxu0 0
        %703 = vmatpush1.bf16.msra.mxu0 0
        %704 = vmatprep.subr.bf16.mxu0 0
        %705 = vmatpush1.bf16.msra.mxu0 0
        %706 = vmatprep.subr.bf16.mxu0 0
        %707 = vmatpush1.bf16.msra.mxu0 0
        %708 = vmatprep.subr.bf16.mxu0 0
        %709 = vmatpush1.bf16.msra.mxu0 0
        %710 = vmatprep.subr.bf16.mxu0 0
        %711 = vmatpush1.bf16.msra.mxu0 0
        %712 = vmatprep.subr.bf16.mxu0 0
        %713 = vmatpush1.bf16.msra.mxu0 0
        %714 = vmatprep.subr.bf16.mxu0 0
        %715 = vmatpush1.bf16.msra.mxu0 0
        %716 = vmatprep.subr.bf16.mxu0 0
        %717 = vmatpush1.bf16.msra.mxu0 0
        %718 = vmatprep.mubr.bf16.mxu0 0
        %719 = vmatmul.mubr.bf16.gmra.mrb[0].mxu0 %v677
        %v720 = vpop.f32.mrb[0].mxu0
        %v721 = vadd.f32 %v651, %v720
        %v722 = vpop.f32.mrb[0].mxu0
        %v723 = vpop.f32.mrb[0].mxu0
        %v724 = vadd.f32 %v654, %v723
        %v725 = vpop.f32.mrb[0].mxu0
        %726 = vmatprep.mubr.bf16.mxu0 0
        %727 = vmatmul.mubr.bf16.gmra.mrb[0].mxu0 %v680
        %v728 = vpop.f32.mrb[0].mxu0
        %v729 = vadd.f32 %v659, %v728
        %v730 = vpop.f32.mrb[0].mxu0
        %v731 = vpop.f32.mrb[0].mxu0
        %v732 = vadd.f32 %v662, %v731
        %v733 = vpop.f32.mrb[0].mxu0
        %734 = vdwg.mxu0
        %v735 = vld [vmem:[%s6] sm:$0xff]
        %v736 = vld [vmem:[%s6 + $0x8] sm:$0xff]
        %v737 = vld [vmem:[%s6 + $0x10] sm:$0xff]
        %v738 = vld [vmem:[%s6 + $0x18] sm:$0xff]
        %740 = vset.pattern.permute.xlu0 0
        %741 = vperm.xlu0 %740, %v735
        %v742 = vpop.permute.xlu0 %741
        %745 = vset.pattern.permute.xlu0 0
        %746 = vperm.xlu0 %745, %v736
        %v747 = vpop.permute.xlu0 %746
        %750 = vset.pattern.permute.xlu0 0
        %751 = vperm.xlu0 %750, %v737
        %v752 = vpop.permute.xlu0 %751
        %755 = vset.pattern.permute.xlu0 0
        %756 = vperm.xlu0 %755, %v738
        %v757 = vpop.permute.xlu0 %756
        %v759 = vadd.f32 %v721, %v742
        %v760 = vadd.f32 %v724, %v747
        %v761 = vadd.f32 %v729, %v752
        %v762 = vadd.f32 %v732, %v757
        %v763 = vmax.f32 %v759, 0.0
        %v764 = vmax.f32 %v760, 0.0
        %v765 = vmax.f32 %v761, 0.0
        %v766 = vmax.f32 %v762, 0.0
        %v767 = vld [vmem:[%s7] sm:$0xf]
        %v768 = vld [vmem:[%s7 + $0x4] sm:$0xf]
        %v769 = vld [vmem:[%s8] sm:$0xff]
        %v770 = vld [vmem:[%s8 + $0x8] sm:$0xff]
        %v771 = vpack.c.bf16 %v764, %v763
        %v772 = vpack.c.bf16 %v766, %v765
        %774 = vset.pattern.permute.xlu0 0
        %775 = vperm.xlu0 %774, %v769
        %v776 = vpop.permute.xlu0 %775
        %779 = vset.pattern.permute.xlu0 0
        %780 = vperm.xlu0 %779, %v770
        %v781 = vpop.permute.xlu0 %780
        %v785 = vunpack.c.l.b16 %v767
        %v786 = vunpack.c.l.b16 %v768
        %v787 = vpack.c.b16 %v786, %v785
        %vm788 = vcmask 261120
        %v790 = vsel %vm788, %v787, 0
        %792 = vmatprep.subr.bf16.mxu0 0
        %793 = vmatpush1.bf16.msra.mxu0 %v771
        %794 = vmatprep.subr.bf16.mxu0 0
        %795 = vmatpush1.bf16.msra.mxu0 %v772
        %796 = vmatprep.subr.bf16.mxu0 0
        %797 = vmatpush1.bf16.msra.mxu0 0
        %798 = vmatprep.subr.bf16.mxu0 0
        %799 = vmatpush1.bf16.msra.mxu0 0
        %800 = vmatprep.subr.bf16.mxu0 0
        %801 = vmatpush1.bf16.msra.mxu0 0
        %802 = vmatprep.subr.bf16.mxu0 0
        %803 = vmatpush1.bf16.msra.mxu0 0
        %804 = vmatprep.subr.bf16.mxu0 0
        %805 = vmatpush1.bf16.msra.mxu0 0
        %806 = vmatprep.subr.bf16.mxu0 0
        %807 = vmatpush1.bf16.msra.mxu0 0
        %808 = vmatprep.subr.bf16.mxu0 0
        %809 = vmatpush1.bf16.msra.mxu0 0
        %810 = vmatprep.subr.bf16.mxu0 0
        %811 = vmatpush1.bf16.msra.mxu0 0
        %812 = vmatprep.subr.bf16.mxu0 0
        %813 = vmatpush1.bf16.msra.mxu0 0
        %814 = vmatprep.subr.bf16.mxu0 0
        %815 = vmatpush1.bf16.msra.mxu0 0
        %816 = vmatprep.subr.bf16.mxu0 0
        %817 = vmatpush1.bf16.msra.mxu0 0
        %818 = vmatprep.subr.bf16.mxu0 0
        %819 = vmatpush1.bf16.msra.mxu0 0
        %820 = vmatprep.subr.bf16.mxu0 0
        %821 = vmatpush1.bf16.msra.mxu0 0
        %822 = vmatprep.subr.bf16.mxu0 0
        %823 = vmatpush1.bf16.msra.mxu0 0
        %824 = vmatprep.mubr.bf16.mxu0 0
        %825 = vmatmul.mubr.bf16.gmra.mrb[0].mxu0 %v790
        %v826 = vpop.f32.mrb[0].mxu0
        %v827 = vadd.f32 %v776, %v826
        %v828 = vpop.f32.mrb[0].mxu0
        %v829 = vpop.f32.mrb[0].mxu0
        %v830 = vadd.f32 %v781, %v829
        %v831 = vpop.f32.mrb[0].mxu0
        %832 = vdwg.mxu0
        %v833 = vmax.f32 %v827, 0.0
        %v834 = vmax.f32 %v830, 0.0
        %835 = vst [vmem:[%s394] sm:$0xff] %v833
        %836 = vst [vmem:[%s394 + $0x8] sm:$0xff] %v834
        %s837 = sand.u32 %s258, 1
        %s838 = scalar_lea.sflag [#allocation3], %s837
        %s839 = sand.u32 %s258, 1
        %s840 = smul.addr %s839, 16
        %s841 = scalar_lea.vmem [#allocation2], %s840
        // Predicated region
        $region57: #{tpu_custom_call.1} parent=55 // pred_check
          %p842 = pneg %p268
        $region58: #{tpu_custom_call.1} parent=55 // pred_check_branch
          %844 = sbr.rel (%p842) target = $region60
        $region59: #{tpu_custom_call.1} parent=55 // pred_region
          %s846 = ssub.s32 256, 256
          %847 = vsyncadd %s838, %s846
          %s848 = smul.addr %s27, 2
          %s849 = sadd.s32 %s28, %s848
          %s850 = smul.addr %s849, 128
          %s851 = scalar_lea.hbm %s9, %s850
          %s852 = sshll.u32 %s841, 4
          %s853 = int_to_ptr.vmem [resolvable:$true] %s852
          %858 = dma.vmem_to_hbm [thread:$0]  %s853, 256, %s851, %s838, 128, 128, 8
        $region60: #{tpu_custom_call.1} parent=55 // pred_fallthru
          _
      $region56: #{tpu_custom_call.1} parent=5 // pred_fallthru
        _
      %p859 = scmp.le.s32.totalorder 2, %s18
      // Predicated region
      $region61: #{tpu_custom_call.1} parent=5 // pred_check
        %p860 = pneg %p859
      $region62: #{tpu_custom_call.1} parent=5 // pred_check_branch
        %862 = sbr.rel (%p860) target = $region64
      $region63: #{tpu_custom_call.1} parent=5 // pred_region
        %s863 = ssub.s32 %s18, 2
        // Predicated region
        $region65: #{tpu_custom_call.1} parent=63 // pred_check
          %p864 = pneg %p274
        $region66: #{tpu_custom_call.1} parent=63 // pred_check_branch
          %866 = sbr.rel (%p864) target = $region68
        $region67: #{tpu_custom_call.1} parent=63 // pred_region
          %s867 = sand.u32 %s259, 1
          %s868 = scalar_lea.sflag [#allocation3], %s867
          %s869 = sand.u32 %s259, 1
          %s870 = smul.addr %s869, 16
          %s871 = scalar_lea.vmem [#allocation2], %s870
          %872 = dma.done %s868, 256
        $region68: #{tpu_custom_call.1} parent=63 // pred_fallthru
          _
      $region64: #{tpu_custom_call.1} parent=5 // pred_fallthru
        _
    $region6: #{tpu_custom_call.1} parent=1 // loop_footer
      %s22 = sadd.s32 1, %s18
    $region7: #{tpu_custom_call.1} parent=1 // loop_footer_branch
      %17 = sbr.rel target = $region3
    $region8: #{tpu_custom_call.1} parent=1 // loop_exit
      _
    %873 = vsyncpa [#allocation3], 1
    %s874 = scalar_lea.sflag [#allocation3], 1
    %875 = vsyncpa %s874, 1

</llo_original>
